<compile_context>
chip_gen: v7x
topology: tpu7x:2x2x1
jax: 0.10.0
libtpu: 0.0.40
codegen_flags: <defaults>
</compile_context>

<pallas_src>
import functools

import jax
import jax.numpy as jnp
from jax.experimental import pallas as pl
from jax.experimental.pallas import tpu as pltpu

EPS = 1e-5  # nn.BatchNorm2d default


def _round_up(x, m):
    return ((x + m - 1) // m) * m


def _fold_lanes(v, reps, chan):
    """Sum the `reps` lane groups of a (1, reps*chan) vector.

    Lane l holds channel (l % chan); after folding, every lane holds the total
    for its channel, already replicated in the layout needed for broadcast."""
    if reps == 1:
        return v
    out = v
    for k in range(1, reps):
        out = out + pltpu.roll(v, shift=k * chan, axis=1)
    return out


def _bn_kernel(x_ref, g_ref, b_ref, o_ref,
               s_acc, q_acc, scale_sc, shift_sc, stash,
               *, count, reps, chan, tile, tail_rows, resident):
    p = pl.program_id(0)          # phase: 0 = statistics, 1 = normalize
    t = pl.program_id(1)          # row-tile index
    n_t = pl.num_programs(1)

    @pl.when(jnp.logical_and(p == 0, t == 0))
    def _():
        s_acc[...] = jnp.zeros_like(s_acc)
        q_acc[...] = jnp.zeros_like(q_acc)

    # ---- Phase 0: per-lane sum / sumsq accumulation (+ VMEM stash) ----
    @pl.when(p == 0)
    def _():
        if resident:
            off = pl.multiple_of(t * tile, 8)
            stash[pl.ds(off, tile), :] = x_ref[...]
        x = x_ref[...].astype(jnp.float32)
        if tail_rows != tile:     # static: only emitted when a partial tail exists
            nrows = jnp.where(t == n_t - 1, jnp.int32(tail_rows), jnp.int32(tile))
            rid = jax.lax.broadcasted_iota(jnp.int32, x.shape, 0)
            x = jnp.where(rid < nrows, x, 0.0)   # OOB block contents are unspecified
        s_acc[...] += jnp.sum(x, axis=0, keepdims=True)
        q_acc[...] += jnp.sum(x * x, axis=0, keepdims=True)

    # ---- Phase 1, first step: fold lane groups, derive scale/shift ----
    @pl.when(jnp.logical_and(p == 1, t == 0))
    def _():
        inv = jnp.float32(1.0 / count)
        mean = _fold_lanes(s_acc[...], reps, chan) * inv
        var = _fold_lanes(q_acc[...], reps, chan) * inv - mean * mean
        var = jnp.maximum(var, 0.0)               # guard against cancellation
        rstd = jax.lax.rsqrt(var + jnp.float32(EPS))
        scale = g_ref[...] * rstd
        scale_sc[...] = scale
        shift_sc[...] = b_ref[...] - mean * scale

    # ---- Phase 1: normalize (from VMEM stash when resident) ----
    @pl.when(p == 1)
    def _():
        if resident:
            off = pl.multiple_of(t * tile, 8)
            x = stash[pl.ds(off, tile), :].astype(jnp.float32)
        else:
            x = x_ref[...].astype(jnp.float32)
        o_ref[...] = (x * scale_sc[...] + shift_sc[...]).astype(o_ref.dtype)


def _vmem_capacity_bytes():
    try:
        return int(pltpu.get_tpu_info().vmem_capacity_bytes)
    except Exception:
        return 64 << 20   # conservative fallback: v7x per-TensorCore VMEM


@functools.partial(jax.jit, static_argnames=("row_tile", "force_resident"))
def batch_norm_edge(e, gamma, beta, *, row_tile=None, force_resident=None):
    """e: (B, N, N, H). gamma, beta: (H,). Returns (B, N, N, H)."""
    B, N1, N2, H = e.shape
    rows = B * N1 * N2            # per-channel element count

    # Lane-dense repack (free, layout-preserving reshape): (rows, H) ->
    # (rows/reps, reps*H) so the last dim is a multiple of 128 lanes and all
    # output stores are unmasked full-lane vst.  Channel of lane l is l % H.
    reps = 1
    if (H % 128 != 0) and (128 % H == 0) and (rows % (128 // H) == 0):
        reps = 128 // H
    rows_p = rows // reps
    W = reps * H

    x = e.reshape(rows_p, W)
    gamma_t = jnp.tile(gamma.astype(jnp.float32).reshape(1, H), (1, reps))
    beta_t = jnp.tile(beta.astype(jnp.float32).reshape(1, H), (1, reps))

    itemsize = jnp.dtype(e.dtype).itemsize

    # --- Row-tile sizing: >=512 rows saturates HBM streaming, >4096 buys
    #     little; ~1 MiB of input per tile.
    if row_tile is None:
        tile = max(512, min(4096, (1 << 20) // max(1, W * itemsize)))
    else:
        tile = row_tile
    if rows_p >= 8:
        tile = min(tile, (rows_p // 8) * 8)
    tile = max(8, (tile // 8) * 8)
    n_tiles = pl.cdiv(rows_p, tile)
    tail_rows = rows_p - (n_tiles - 1) * tile   # valid rows in the last tile

    # --- Generation-aware VMEM budgeting (128 MiB v5e/v6e, 64 MiB v7x).
    vmem_cap = _vmem_capacity_bytes()
    vmem_limit = int(min((vmem_cap * 3) // 4, 112 << 20))
    # pipeline footprint: in + out tiles double-buffered + in-kernel f32 temps
    pipe_bytes = 2 * 2 * tile * W * itemsize + 2 * tile * W * 4
    stash_bytes = n_tiles * tile * W * itemsize
    if force_resident is None:
        resident = stash_bytes + pipe_bytes + (8 << 20) <= vmem_limit
    else:
        resident = bool(force_resident)

    if resident:
        # Pin the input block during phase 1 so the pipeline does not
        # re-fetch: phase 0 reads tile t, phase 1 stays on the last block.
        in_map = lambda p, t: (t * (1 - p) + (n_tiles - 1) * p, 0)
        stash_spec = pltpu.VMEM((n_tiles * tile, W), e.dtype)
    else:
        in_map = lambda p, t: (t, 0)            # re-stream input in phase 1
        stash_spec = pltpu.VMEM((8, W), e.dtype)  # unused dummy

    kernel = functools.partial(
        _bn_kernel, count=rows, reps=reps, chan=H, tile=tile,
        tail_rows=tail_rows, resident=resident)

    y = pl.pallas_call(
        kernel,
        out_shape=jax.ShapeDtypeStruct((rows_p, W), e.dtype),
        grid_spec=pltpu.PrefetchScalarGridSpec(
            num_scalar_prefetch=0,
            grid=(2, n_tiles),
            in_specs=[
                pl.BlockSpec((tile, W), in_map),
                pl.BlockSpec((1, W), lambda p, t: (0, 0)),
                pl.BlockSpec((1, W), lambda p, t: (0, 0)),
            ],
            # Output block stays pinned at 0 through phase 0 (never written),
            # then streams out tile-by-tile in phase 1.
            out_specs=pl.BlockSpec((tile, W), lambda p, t: (p * t, 0)),
            scratch_shapes=[
                pltpu.VMEM((1, W), jnp.float32),   # per-lane sum
                pltpu.VMEM((1, W), jnp.float32),   # per-lane sumsq
                pltpu.VMEM((1, W), jnp.float32),   # scale
                pltpu.VMEM((1, W), jnp.float32),   # shift
                stash_spec,                        # resident copy of the input
            ],
        ),
        compiler_params=pltpu.CompilerParams(
            dimension_semantics=("arbitrary", "arbitrary"),
            vmem_limit_bytes=vmem_limit),
    )(x, gamma_t, beta_t)

    return y.reshape(B, N1, N2, H)


if __name__ == "__main__":
    # Small shapes consistent with the module: batch=2, num_nodes=8, hidden=32.
    B, N, H = 2, 8, 32
    key = jax.random.PRNGKey(0)
    e = jax.random.normal(key, (B, N, N, H), dtype=jnp.float32) * 2.0 + 0.5

    # Deterministic non-trivial affine params (BatchNorm2d default is 1 / 0).
    gamma = 1.0 + 0.1 * jnp.arange(H, dtype=jnp.float32)
    beta = 0.01 * jnp.arange(H, dtype=jnp.float32)

    # Pure-JAX reference (batch statistics over B, N, N per channel).
    mean = jnp.mean(e, axis=(0, 1, 2))
    var = jnp.mean((e - mean) ** 2, axis=(0, 1, 2))
    ref = (e - mean) * jax.lax.rsqrt(var + EPS) * gamma + beta

    # Default (auto) path: small tensor -> VMEM-resident, 1 read + 1 write.
    out = jax.block_until_ready(batch_norm_edge(e, gamma, beta))
    assert jnp.max(jnp.abs(out - ref)) < 1e-4, "resident/auto path mismatch"

    # Streaming path: forced non-resident, multi-tile with a PARTIAL last
    # block (exercises in-kernel tail masking + masked output stores).
    out2 = jax.block_until_ready(
        batch_norm_edge(e, gamma, beta, row_tile=24, force_resident=False))
    assert jnp.max(jnp.abs(out2 - ref)) < 1e-4, "streaming path mismatch"

    # Resident path with several tiles (exercises the VMEM stash + pinned
    # phase-1 input index map).
    out3 = jax.block_until_ready(
        batch_norm_edge(e, gamma, beta, row_tile=8, force_resident=True))
    assert jnp.max(jnp.abs(out3 - ref)) < 1e-4, "multi-tile resident mismatch"

    print("KERNEL_OK")
</pallas_src>

<mosaic_0001>
module attributes {stable_mosaic.version = 11 : i64} {
  func.func @_bn_kernel(%arg0: i32, %arg1: i32, %arg2: memref<32x128xf32, #tpu.memory_space<vmem>>, %arg3: memref<1x128xf32, #tpu.memory_space<vmem>>, %arg4: memref<1x128xf32, #tpu.memory_space<vmem>>, %arg5: memref<32x128xf32, #tpu.memory_space<vmem>>, %arg6: memref<1x128xf32, #tpu.memory_space<vmem>>, %arg7: memref<1x128xf32, #tpu.memory_space<vmem>>, %arg8: memref<1x128xf32, #tpu.memory_space<vmem>>, %arg9: memref<1x128xf32, #tpu.memory_space<vmem>>, %arg10: memref<32x128xf32, #tpu.memory_space<vmem>>) attributes {dimension_semantics = [#tpu.dimension_semantics<arbitrary>, #tpu.dimension_semantics<arbitrary>], iteration_bounds = array<i64: 2, 1>, scalar_prefetch = 0 : i64, scratch_operands = 5 : i64, tpu.core_type = #tpu.core_type<tc>, window_params = [{transform_indices = @transform_0, window_bounds = array<i64: 32, 128>}, {pipeline_mode = #tpu.pipeline_mode<synchronous>, transform_indices = @transform_1, window_bounds = array<i64: 1, 128>}, {pipeline_mode = #tpu.pipeline_mode<synchronous>, transform_indices = @transform_2, window_bounds = array<i64: 1, 128>}, {transform_indices = @transform_3, window_bounds = array<i64: 32, 128>}]} {
    %c0_i32 = arith.constant 0 : i32
    %0 = arith.cmpi eq, %arg0, %c0_i32 : i32
    %c0_i32_0 = arith.constant 0 : i32
    %1 = arith.cmpi eq, %arg1, %c0_i32_0 : i32
    %2 = arith.andi %0, %1 : i1
    %3 = arith.extui %2 : i1 to i32
    %c0_i32_1 = arith.constant 0 : i32
    %4 = arith.cmpi ne, %3, %c0_i32_1 : i32
    scf.if %4 {
      %cst = arith.constant 0.000000e+00 : f32
      %16 = vector.broadcast %cst : f32 to vector<1x128xf32>
      %c0 = arith.constant 0 : index
      %c0_8 = arith.constant 0 : index
      %17 = vector.load %arg6[%c0, %c0_8] : memref<1x128xf32, #tpu.memory_space<vmem>>, vector<1x128xf32>
      tpu.vector_store %arg6[%c0, %c0_8], %16 {strides = array<i32>} : memref<1x128xf32, #tpu.memory_space<vmem>>, vector<1x128xf32>,
      %cst_9 = arith.constant 0.000000e+00 : f32
      %18 = vector.broadcast %cst_9 : f32 to vector<1x128xf32>
      %c0_10 = arith.constant 0 : index
      %c0_11 = arith.constant 0 : index
      %19 = vector.load %arg7[%c0_10, %c0_11] : memref<1x128xf32, #tpu.memory_space<vmem>>, vector<1x128xf32>
      tpu.vector_store %arg7[%c0_10, %c0_11], %18 {strides = array<i32>} : memref<1x128xf32, #tpu.memory_space<vmem>>, vector<1x128xf32>,
    } else {
    }
    %c0_i32_2 = arith.constant 0 : i32
    %5 = arith.cmpi eq, %arg0, %c0_i32_2 : i32
    %6 = arith.extui %5 : i1 to i32
    %c0_i32_3 = arith.constant 0 : i32
    %7 = arith.cmpi ne, %6, %c0_i32_3 : i32
    scf.if %7 {
      %c32_i32 = arith.constant 32 : i32
      %16 = arith.muli %arg1, %c32_i32 : i32
      %17 = tpu.assume_multiple %16, 8 : i32
      %c0 = arith.constant 0 : index
      %c0_8 = arith.constant 0 : index
      %18 = vector.load %arg2[%c0, %c0_8] : memref<32x128xf32, #tpu.memory_space<vmem>>, vector<32x128xf32>
      %19 = arith.index_cast %17 : i32 to index
      %c0_9 = arith.constant 0 : index
      %20 = vector.load %arg10[%19, %c0_9] : memref<32x128xf32, #tpu.memory_space<vmem>>, vector<32x128xf32>
      tpu.vector_store %arg10[%19, %c0_9], %18 {strides = array<i32>} : memref<32x128xf32, #tpu.memory_space<vmem>>, vector<32x128xf32>,
      %c0_10 = arith.constant 0 : index
      %c0_11 = arith.constant 0 : index
      %21 = vector.load %arg2[%c0_10, %c0_11] : memref<32x128xf32, #tpu.memory_space<vmem>>, vector<32x128xf32>
      %c0_12 = arith.constant 0 : index
      %c0_13 = arith.constant 0 : index
      %22 = vector.load %arg6[%c0_12, %c0_13] : memref<1x128xf32, #tpu.memory_space<vmem>>, vector<1x128xf32>
      %cst = arith.constant dense<0.000000e+00> : vector<128xf32>
      %23 = vector.multi_reduction <add>, %21, %cst [0] : vector<32x128xf32> to vector<128xf32>
      %24 = vector.shape_cast %23 : vector<128xf32> to vector<1x128xf32>
      %25 = arith.addf %22, %24 : vector<1x128xf32>
      %c0_14 = arith.constant 0 : index
      %c0_15 = arith.constant 0 : index
      %26 = vector.load %arg6[%c0_14, %c0_15] : memref<1x128xf32, #tpu.memory_space<vmem>>, vector<1x128xf32>
      tpu.vector_store %arg6[%c0_14, %c0_15], %25 {strides = array<i32>} : memref<1x128xf32, #tpu.memory_space<vmem>>, vector<1x128xf32>,
      %c0_16 = arith.constant 0 : index
      %c0_17 = arith.constant 0 : index
      %27 = vector.load %arg7[%c0_16, %c0_17] : memref<1x128xf32, #tpu.memory_space<vmem>>, vector<1x128xf32>
      %28 = arith.mulf %21, %21 : vector<32x128xf32>
      %cst_18 = arith.constant dense<0.000000e+00> : vector<128xf32>
      %29 = vector.multi_reduction <add>, %28, %cst_18 [0] : vector<32x128xf32> to vector<128xf32>
      %30 = vector.shape_cast %29 : vector<128xf32> to vector<1x128xf32>
      %31 = arith.addf %27, %30 : vector<1x128xf32>
      %c0_19 = arith.constant 0 : index
      %c0_20 = arith.constant 0 : index
      %32 = vector.load %arg7[%c0_19, %c0_20] : memref<1x128xf32, #tpu.memory_space<vmem>>, vector<1x128xf32>
      tpu.vector_store %arg7[%c0_19, %c0_20], %31 {strides = array<i32>} : memref<1x128xf32, #tpu.memory_space<vmem>>, vector<1x128xf32>,
    } else {
    }
    %c1_i32 = arith.constant 1 : i32
    %8 = arith.cmpi eq, %arg0, %c1_i32 : i32
    %c0_i32_4 = arith.constant 0 : i32
    %9 = arith.cmpi eq, %arg1, %c0_i32_4 : i32
    %10 = arith.andi %8, %9 : i1
    %11 = arith.extui %10 : i1 to i32
    %c0_i32_5 = arith.constant 0 : i32
    %12 = arith.cmpi ne, %11, %c0_i32_5 : i32
    scf.if %12 {
      %c0 = arith.constant 0 : index
      %c0_8 = arith.constant 0 : index
      %16 = vector.load %arg6[%c0, %c0_8] : memref<1x128xf32, #tpu.memory_space<vmem>>, vector<1x128xf32>
      %c32_i32 = arith.constant 32 : i32
      %17 = tpu.dynamic_rotate %16 by %c32_i32 dim 1 : vector<1x128xf32>, i32 -> vector<1x128xf32>
      %18 = arith.addf %16, %17 : vector<1x128xf32>
      %c64_i32 = arith.constant 64 : i32
      %19 = tpu.dynamic_rotate %16 by %c64_i32 dim 1 : vector<1x128xf32>, i32 -> vector<1x128xf32>
      %20 = arith.addf %18, %19 : vector<1x128xf32>
      %c96_i32 = arith.constant 96 : i32
      %21 = tpu.dynamic_rotate %16 by %c96_i32 dim 1 : vector<1x128xf32>, i32 -> vector<1x128xf32>
      %22 = arith.addf %20, %21 : vector<1x128xf32>
      %cst = arith.constant 7.812500e-03 : f32
      %23 = vector.broadcast %cst : f32 to vector<1x128xf32>
      %24 = arith.mulf %22, %23 : vector<1x128xf32>
      %c0_9 = arith.constant 0 : index
      %c0_10 = arith.constant 0 : index
      %25 = vector.load %arg7[%c0_9, %c0_10] : memref<1x128xf32, #tpu.memory_space<vmem>>, vector<1x128xf32>
      %c32_i32_11 = arith.constant 32 : i32
      %26 = tpu.dynamic_rotate %25 by %c32_i32_11 dim 1 : vector<1x128xf32>, i32 -> vector<1x128xf32>
      %27 = arith.addf %25, %26 : vector<1x128xf32>
      %c64_i32_12 = arith.constant 64 : i32
      %28 = tpu.dynamic_rotate %25 by %c64_i32_12 dim 1 : vector<1x128xf32>, i32 -> vector<1x128xf32>
      %29 = arith.addf %27, %28 : vector<1x128xf32>
      %c96_i32_13 = arith.constant 96 : i32
      %30 = tpu.dynamic_rotate %25 by %c96_i32_13 dim 1 : vector<1x128xf32>, i32 -> vector<1x128xf32>
      %31 = arith.addf %29, %30 : vector<1x128xf32>
      %cst_14 = arith.constant 7.812500e-03 : f32
      %32 = vector.broadcast %cst_14 : f32 to vector<1x128xf32>
      %33 = arith.mulf %31, %32 : vector<1x128xf32>
      %34 = arith.mulf %24, %24 : vector<1x128xf32>
      %35 = arith.subf %33, %34 : vector<1x128xf32>
      %cst_15 = arith.constant 0.000000e+00 : f32
      %36 = vector.broadcast %cst_15 : f32 to vector<1x128xf32>
      %37 = arith.maximumf %35, %36 : vector<1x128xf32>
      %cst_16 = arith.constant 9.99999974E-6 : f32
      %38 = vector.broadcast %cst_16 : f32 to vector<1x128xf32>
      %39 = arith.addf %37, %38 : vector<1x128xf32>
      %40 = math.rsqrt %39 : vector<1x128xf32>
      %c0_17 = arith.constant 0 : index
      %c0_18 = arith.constant 0 : index
      %41 = vector.load %arg3[%c0_17, %c0_18] : memref<1x128xf32, #tpu.memory_space<vmem>>, vector<1x128xf32>
      %42 = arith.mulf %41, %40 : vector<1x128xf32>
      %c0_19 = arith.constant 0 : index
      %c0_20 = arith.constant 0 : index
      %43 = vector.load %arg8[%c0_19, %c0_20] : memref<1x128xf32, #tpu.memory_space<vmem>>, vector<1x128xf32>
      tpu.vector_store %arg8[%c0_19, %c0_20], %42 {strides = array<i32>} : memref<1x128xf32, #tpu.memory_space<vmem>>, vector<1x128xf32>,
      %c0_21 = arith.constant 0 : index
      %c0_22 = arith.constant 0 : index
      %44 = vector.load %arg4[%c0_21, %c0_22] : memref<1x128xf32, #tpu.memory_space<vmem>>, vector<1x128xf32>
      %45 = arith.mulf %24, %42 : vector<1x128xf32>
      %46 = arith.subf %44, %45 : vector<1x128xf32>
      %c0_23 = arith.constant 0 : index
      %c0_24 = arith.constant 0 : index
      %47 = vector.load %arg9[%c0_23, %c0_24] : memref<1x128xf32, #tpu.memory_space<vmem>>, vector<1x128xf32>
      tpu.vector_store %arg9[%c0_23, %c0_24], %46 {strides = array<i32>} : memref<1x128xf32, #tpu.memory_space<vmem>>, vector<1x128xf32>,
    } else {
    }
    %c1_i32_6 = arith.constant 1 : i32
    %13 = arith.cmpi eq, %arg0, %c1_i32_6 : i32
    %14 = arith.extui %13 : i1 to i32
    %c0_i32_7 = arith.constant 0 : i32
    %15 = arith.cmpi ne, %14, %c0_i32_7 : i32
    scf.if %15 {
      %c32_i32 = arith.constant 32 : i32
      %16 = arith.muli %arg1, %c32_i32 : i32
      %17 = tpu.assume_multiple %16, 8 : i32
      %18 = arith.index_cast %17 : i32 to index
      %c0 = arith.constant 0 : index
      %19 = vector.load %arg10[%18, %c0] : memref<32x128xf32, #tpu.memory_space<vmem>>, vector<32x128xf32>
      %c0_8 = arith.constant 0 : index
      %c0_9 = arith.constant 0 : index
      %20 = vector.load %arg8[%c0_8, %c0_9] : memref<1x128xf32, #tpu.memory_space<vmem>>, vector<1x128xf32>
      %21 = vector.broadcast %20 : vector<1x128xf32> to vector<32x128xf32>
      %22 = arith.mulf %19, %21 : vector<32x128xf32>
      %c0_10 = arith.constant 0 : index
      %c0_11 = arith.constant 0 : index
      %23 = vector.load %arg9[%c0_10, %c0_11] : memref<1x128xf32, #tpu.memory_space<vmem>>, vector<1x128xf32>
      %24 = vector.broadcast %23 : vector<1x128xf32> to vector<32x128xf32>
      %25 = arith.addf %22, %24 : vector<32x128xf32>
      %c0_12 = arith.constant 0 : index
      %c0_13 = arith.constant 0 : index
      %26 = vector.load %arg5[%c0_12, %c0_13] : memref<32x128xf32, #tpu.memory_space<vmem>>, vector<32x128xf32>
      tpu.vector_store %arg5[%c0_12, %c0_13], %25 {strides = array<i32>} : memref<32x128xf32, #tpu.memory_space<vmem>>, vector<32x128xf32>,
    } else {
    }
    return
  }
  func.func @transform_0(%arg0: i32, %arg1: i32) -> (i32, i32) {
    %c1_i32 = arith.constant 1 : i32
    %0 = arith.subi %c1_i32, %arg0 : i32
    %1 = arith.muli %arg1, %0 : i32
    %c0_i32 = arith.constant 0 : i32
    %2 = arith.muli %c0_i32, %arg0 : i32
    %3 = arith.addi %1, %2 : i32
    %c0_i32_0 = arith.constant 0 : i32
    %c0_i32_1 = arith.constant 0 : i32
    return %3, %c0_i32_0 : i32, i32
  }
  func.func @transform_1(%arg0: i32, %arg1: i32) -> (i32, i32) {
    %c0_i32 = arith.constant 0 : i32
    %c0_i32_0 = arith.constant 0 : i32
    %c0_i32_1 = arith.constant 0 : i32
    return %c0_i32, %c0_i32_0 : i32, i32
  }
  func.func @transform_2(%arg0: i32, %arg1: i32) -> (i32, i32) {
    %c0_i32 = arith.constant 0 : i32
    %c0_i32_0 = arith.constant 0 : i32
    %c0_i32_1 = arith.constant 0 : i32
    return %c0_i32, %c0_i32_0 : i32, i32
  }
  func.func @transform_3(%arg0: i32, %arg1: i32) -> (i32, i32) {
    %0 = arith.muli %arg0, %arg1 : i32
    %c0_i32 = arith.constant 0 : i32
    %c0_i32_0 = arith.constant 0 : i32
    return %0, %c0_i32 : i32, i32
  }
}

</mosaic_0001>

<llo_original>
// kernel: batch_norm_edge.1
$region0: #{batch_norm_edge.1}
  #allocation0 [shape = 'u32[]', space=smem, size = 0x4, offset = 0x4, fixed_abs, tag = 'smem constant byte address 0x4 - core index']
  #allocation1 [shape = 'u32[144,128]{1,0:T(1,128)}', space=vmem, size = 0x12000, scoped, tag = 'internal scratch']
  #allocation2 [shape = 'f32[1,128]{1,0:T(1,128)}', space=vmem, size = 0x200, scoped, tag = 'scratch operand']
  #allocation3 [shape = 'f32[1,128]{1,0:T(1,128)}', space=vmem, size = 0x200, scoped, tag = 'scratch operand']
  #allocation4 [shape = 'f32[1,128]{1,0:T(1,128)}', space=vmem, size = 0x200, scoped, tag = 'scratch operand']
  #allocation5 [shape = 'f32[1,128]{1,0:T(1,128)}', space=vmem, size = 0x200, scoped, tag = 'scratch operand']
  #allocation6 [shape = 'f32[32,128]{1,0:T(8,128)}', space=vmem, size = 0x4000, scoped, tag = 'scratch operand']
  %s0 = inlined_call_operand.vmem [shape: f32[32,128], index: 0, kind: input, shape index: {}]
  %s1 = inlined_call_operand.vmem [shape: f32[1,128], index: 1, kind: input, shape index: {}]
  %s2 = inlined_call_operand.vmem [shape: f32[1,128], index: 2, kind: input, shape index: {}]
  %s3 = inlined_call_operand.vmem [shape: f32[32,128], index: 3, kind: output, shape index: {}]
  %s4 = sld [smem:[#allocation0]]
  $region61: #{batch_norm_edge.1} parent=0
    _
  %s6 = ssub.s32 1, %s4
  %s7 = scalar_select 0, %s6, %s4
  loop: start=0, step=1, limit=4
  $region2: #{batch_norm_edge.1} parent=0 // loop_pre_header
    _
  $region3: #{batch_norm_edge.1} parent=0 // loop_header
    %s9 = sphi 0, %s13
    %p10 = scmp.ge.s32.totalorder %s9, 4
    %s16 = sphi 0, %s28
    %s17 = sphi 0, %s24
    %s18 = sphi 0, %s16
    %s19 = sphi 0, %s17
    %s20 = sphi 0, %s18
    %s21 = sphi 0, %s19
    %s35 = sphi 0, %s37
    %s38 = sphi 0, %s35
    %s39 = sphi 0, %s38
    %s55 = sphi 0, %s39
    %s59 = sphi 0, %s59
    %s61 = sphi 0, %s59
    %s62 = sphi 0, %s61
    %s76 = sphi 0, %s62
    %s80 = sphi 0, %s80
    %s82 = sphi 0, %s80
    %s83 = sphi 0, %s82
    %s97 = sphi 0, %s83
    %s105 = sphi 0, %s107
    %s108 = sphi 0, %s105
    %s109 = sphi 0, %s108
    %s125 = sphi 0, %s109
  $region4: #{batch_norm_edge.1} parent=0 // loop_header_branch
    %12 = sbr.rel (%p10) target = $region8
  $region5: #{batch_norm_edge.1} parent=0 // loop_body
    %s14 = ssub.s32 %s9, 1
    %s15 = ssub.s32 %s9, 2
    %s22 = sadd.s32 1, %s17
    %p23 = scmp.ge.s32.totalorder %s22, 1
    %s24 = scalar_select %p23, 0, %s22
    %s25 = sadd.s32 1, %s16
    %s26 = scalar_select %p23, %s25, %s16
    %p27 = scmp.ge.s32.totalorder %s26, 2
    %s28 = scalar_select %p27, 0, %s26
    %s29 = ssub.s32 1, %s16
    %s30 = smul.u32 %s17, %s29
    %s31 = ssub.s32 1, %s28
    %s32 = smul.u32 %s24, %s31
    %s33 = ssub.s32 %s30, %s32
    %p34 = scmp.eq.s32.totalorder %s33, 0
    %s36 = sadd.s32 %s35, 1
    %s37 = scalar_select %p34, %s35, %s36
    %p40 = pneg %p34
    %p41 = scmp.eq.s32.totalorder %s9, 1
    %p42 = por %p40, %p41
    %p43 = scmp.ne.s32.totalorder %s35, %s38
    %p44 = scmp.eq.s32.totalorder %s9, 0
    %p45 = por %p43, %p44
    %p46 = scmp.ne.s32.totalorder %s35, %s38
    %p47 = scmp.eq.s32.totalorder %s14, 1
    %p48 = por %p46, %p47
    %p49 = scmp.ne.s32.totalorder %s38, %s39
    %p50 = scmp.eq.s32.totalorder %s14, 0
    %p51 = por %p49, %p50
    %p52 = scmp.ne.s32.totalorder %s38, %s39
    %p53 = scmp.eq.s32.totalorder %s15, 1
    %p54 = por %p52, %p53
    %p56 = scmp.ne.s32.totalorder %s39, %s55
    %p57 = scmp.eq.s32.totalorder %s15, 0
    %p58 = por %p56, %p57
    %s60 = sadd.s32 %s59, 1
    %p63 = scmp.eq.s32.totalorder %s9, 1
    %p64 = scmp.ne.s32.totalorder %s59, %s61
    %p65 = scmp.eq.s32.totalorder %s9, 0
    %p66 = por %p64, %p65
    %p67 = scmp.ne.s32.totalorder %s59, %s61
    %p68 = scmp.eq.s32.totalorder %s14, 1
    %p69 = por %p67, %p68
    %p70 = scmp.ne.s32.totalorder %s61, %s62
    %p71 = scmp.eq.s32.totalorder %s14, 0
    %p72 = por %p70, %p71
    %p73 = scmp.ne.s32.totalorder %s61, %s62
    %p74 = scmp.eq.s32.totalorder %s15, 1
    %p75 = por %p73, %p74
    %p77 = scmp.ne.s32.totalorder %s62, %s76
    %p78 = scmp.eq.s32.totalorder %s15, 0
    %p79 = por %p77, %p78
    %s81 = sadd.s32 %s80, 1
    %p84 = scmp.eq.s32.totalorder %s9, 1
    %p85 = scmp.ne.s32.totalorder %s80, %s82
    %p86 = scmp.eq.s32.totalorder %s9, 0
    %p87 = por %p85, %p86
    %p88 = scmp.ne.s32.totalorder %s80, %s82
    %p89 = scmp.eq.s32.totalorder %s14, 1
    %p90 = por %p88, %p89
    %p91 = scmp.ne.s32.totalorder %s82, %s83
    %p92 = scmp.eq.s32.totalorder %s14, 0
    %p93 = por %p91, %p92
    %p94 = scmp.ne.s32.totalorder %s82, %s83
    %p95 = scmp.eq.s32.totalorder %s15, 1
    %p96 = por %p94, %p95
    %p98 = scmp.ne.s32.totalorder %s83, %s97
    %p99 = scmp.eq.s32.totalorder %s15, 0
    %p100 = por %p98, %p99
    %s101 = smul.u32 %s16, %s17
    %s102 = smul.u32 %s28, %s24
    %s103 = ssub.s32 %s101, %s102
    %p104 = scmp.eq.s32.totalorder %s103, 0
    %s106 = sadd.s32 %s105, 1
    %s107 = scalar_select %p104, %s105, %s106
    %p110 = pneg %p104
    %p111 = scmp.eq.s32.totalorder %s9, 1
    %p112 = por %p110, %p111
    %p113 = scmp.ne.s32.totalorder %s105, %s108
    %p114 = scmp.eq.s32.totalorder %s9, 0
    %p115 = por %p113, %p114
    %p116 = scmp.ne.s32.totalorder %s105, %s108
    %p117 = scmp.eq.s32.totalorder %s14, 1
    %p118 = por %p116, %p117
    %p119 = scmp.ne.s32.totalorder %s108, %s109
    %p120 = scmp.eq.s32.totalorder %s14, 0
    %p121 = por %p119, %p120
    %p122 = scmp.ne.s32.totalorder %s108, %s109
    %p123 = scmp.eq.s32.totalorder %s15, 1
    %p124 = por %p122, %p123
    %p126 = scmp.ne.s32.totalorder %s109, %s125
    %p127 = scmp.eq.s32.totalorder %s15, 0
    %p128 = por %p126, %p127
    %p129 = scmp.le.s32.totalorder 1, %s9
    %p130 = scmp.lt.s32.totalorder %s9, 3
    %p131 = pnand %p129, %p130
    %p132 = pneg %p131
    // Predicated region
    $region9: #{batch_norm_edge.1} parent=5 // pred_check
      _
    $region10: #{batch_norm_edge.1} parent=5 // pred_check_branch
      %134 = sbr.rel (%p131) target = $region12
    $region11: #{batch_norm_edge.1} parent=5 // pred_region
      %s135 = ssub.s32 %s9, 1
      // Predicated region
      $region13: #{batch_norm_edge.1} parent=11 // pred_check
        %p136 = pneg %p72
      $region14: #{batch_norm_edge.1} parent=11 // pred_check_branch
        %138 = sbr.rel (%p136) target = $region16
      $region15: #{batch_norm_edge.1} parent=11 // pred_region
        _
      $region16: #{batch_norm_edge.1} parent=11 // pred_fallthru
        _
      // Predicated region
      $region17: #{batch_norm_edge.1} parent=11 // pred_check
        %p139 = pneg %p93
      $region18: #{batch_norm_edge.1} parent=11 // pred_check_branch
        %141 = sbr.rel (%p139) target = $region20
      $region19: #{batch_norm_edge.1} parent=11 // pred_region
        _
      $region20: #{batch_norm_edge.1} parent=11 // pred_fallthru
        _
    $region12: #{batch_norm_edge.1} parent=5 // pred_fallthru
      _
    %p142 = scmp.lt.s32.totalorder %s9, 2
    // Predicated region
    $region21: #{batch_norm_edge.1} parent=5 // pred_check
      %p143 = pneg %p142
    $region22: #{batch_norm_edge.1} parent=5 // pred_check_branch
      %145 = sbr.rel (%p143) target = $region24
    $region23: #{batch_norm_edge.1} parent=5 // pred_region
      // Predicated region
      $region25: #{batch_norm_edge.1} parent=23 // pred_check
        %p146 = pneg %p45
      $region26: #{batch_norm_edge.1} parent=23 // pred_check_branch
        %148 = sbr.rel (%p146) target = $region28
      $region27: #{batch_norm_edge.1} parent=23 // pred_region
        %s149 = ssub.s32 1, %s16
        %s150 = smul.u32 %s17, %s149
        %s151 = smul.u32 4, %s150
        %p152 = scmp.lt.s32.totalorder %s151, 3
        %s153 = scalar_select %p152, %s151, 3
        %s154 = smul.addr %s153, 8
        %s155 = scalar_lea.vmem %s0, %s154
        %s156 = ssub.s32 1, %s16
        %s157 = smul.u32 %s17, %s156
        %s158 = smul.u32 4, %s157
      $region28: #{batch_norm_edge.1} parent=23 // pred_fallthru
        _
    $region24: #{batch_norm_edge.1} parent=5 // pred_fallthru
      _
    %p159 = scmp.le.s32.totalorder 1, %s9
    %p160 = scmp.lt.s32.totalorder %s9, 3
    %p161 = pnand %p159, %p160
    %p162 = pneg %p161
    // Predicated region
    $region29: #{batch_norm_edge.1} parent=5 // pred_check
      _
    $region30: #{batch_norm_edge.1} parent=5 // pred_check_branch
      %164 = sbr.rel (%p161) target = $region32
    $region31: #{batch_norm_edge.1} parent=5 // pred_region
      %s165 = ssub.s32 %s9, 1
      %s166 = ssub.s32 1, %s18
      %s167 = smul.u32 %s19, %s166
      %s168 = smul.u32 4, %s167
      %p169 = scmp.lt.s32.totalorder %s168, 3
      %s170 = scalar_select %p169, %s168, 3
      %s171 = smul.addr %s170, 8
      %s172 = scalar_lea.vmem %s0, %s171
      %p173 = pneg %p51
      %p174 = pneg %p48
      %p175 = pneg %p72
      %p176 = pneg %p69
      %p177 = pneg %p93
      %p178 = pneg %p90
      %p179 = pneg %p121
      %p180 = pneg %p118
      %s181 = smul.u32 %s18, %s19
      %s182 = smul.u32 4, %s181
      %p183 = scmp.lt.s32.totalorder %s182, 3
      %s184 = scalar_select %p183, %s182, 3
      %s185 = smul.addr %s184, 8
      %s186 = scalar_lea.vmem %s3, %s185
      %s187 = ssub.s32 1, %s18
      %s188 = smul.u32 %s19, %s187
      %s189 = smul.u32 4, %s188
      %p190 = scmp.lt.s32.totalorder %s189, 3
      %s191 = scalar_select %p190, %s189, 3
      %s192 = smul.addr %s191, 8
      %s193 = scalar_lea.vmem %s0, %s192
      %s194 = ssub.s32 1, %s18
      %s195 = smul.u32 %s19, %s194
      %s196 = smul.u32 4, %s195
      %s197 = smul.u32 %s18, %s19
      %s198 = smul.u32 4, %s197
      %p199 = scmp.lt.s32.totalorder %s198, 3
      %s200 = scalar_select %p199, %s198, 3
      %s201 = smul.addr %s200, 8
      %s202 = scalar_lea.vmem %s3, %s201
      %s203 = smul.u32 %s18, %s19
      %s204 = smul.u32 4, %s203
      %p205 = scmp.eq.s32.totalorder %s18, 0
      %p206 = scmp.eq.s32.totalorder %s19, 0
      %p207 = pnand %p205, %p206
      %p208 = pneg %p207
      // Predicated region
      $region33: #{batch_norm_edge.1} parent=31 // pred_check
        _
      $region34: #{batch_norm_edge.1} parent=31 // pred_check_branch
        %210 = sbr.rel (%p207) target = $region36
      $region35: #{batch_norm_edge.1} parent=31 // pred_region
        %211 = vst [vmem:[#allocation2] sm:$0x1] 0.0
        %212 = vst [vmem:[#allocation3] sm:$0x1] 0.0
      $region36: #{batch_norm_edge.1} parent=31 // pred_fallthru
        _
      // Predicated region
      $region37: #{batch_norm_edge.1} parent=31 // pred_check
        %p213 = pneg %p205
      $region38: #{batch_norm_edge.1} parent=31 // pred_check_branch
        %215 = sbr.rel (%p213) target = $region40
      $region39: #{batch_norm_edge.1} parent=31 // pred_region
        %s216 = smul.u32 %s19, 32
        %v217 = vld [vmem:[%s193] sm:$0xff]
        %v218 = vld [vmem:[%s193 + $0x8] sm:$0xff]
        %v219 = vld [vmem:[%s193 + $0x10] sm:$0xff]
        %v220 = vld [vmem:[%s193 + $0x18] sm:$0xff]
        %s221 = scalar_lea.vmem [#allocation6], %s216
        %222 = vst [vmem:[%s221] sm:$0xff] %v217
        %223 = vst [vmem:[%s221 + $0x8] sm:$0xff] %v218
        %224 = vst [vmem:[%s221 + $0x10] sm:$0xff] %v219
        %225 = vst [vmem:[%s221 + $0x18] sm:$0xff] %v220
        %v226 = vld [vmem:[%s193] sm:$0xff]
        %v227 = vld [vmem:[%s193 + $0x8] sm:$0xff]
        %v228 = vld [vmem:[%s193 + $0x10] sm:$0xff]
        %v229 = vld [vmem:[%s193 + $0x18] sm:$0xff]
        %v230 = vld [vmem:[#allocation2] sm:$0x1]
        %v231 = vadd.f32 %v226, %v227
        %v232 = vadd.f32 %v231, %v228
        %v233 = vadd.f32 %v232, %v229
        %v234 = vrot.slane %v233, 4
        %v235 = vadd.f32 %v233, %v234
        %v236 = vrot.slane %v235, 2
        %v237 = vadd.f32 %v235, %v236
        %v238 = vrot.slane %v237, 1
        %v239 = vadd.f32 %v237, %v238
        %v240 = vadd.f32 %v230, %v239
        %241 = vst [vmem:[#allocation2] sm:$0x1] %v240
        %v242 = vld [vmem:[#allocation3] sm:$0x1]
        %v243 = vmul.f32 %v226, %v226
        %v244 = vmul.f32 %v227, %v227
        %v245 = vmul.f32 %v228, %v228
        %v246 = vmul.f32 %v229, %v229
        %v247 = vadd.f32 %v243, %v244
        %v248 = vadd.f32 %v247, %v245
        %v249 = vadd.f32 %v248, %v246
        %v250 = vrot.slane %v249, 4
        %v251 = vadd.f32 %v249, %v250
        %v252 = vrot.slane %v251, 2
        %v253 = vadd.f32 %v251, %v252
        %v254 = vrot.slane %v253, 1
        %v255 = vadd.f32 %v253, %v254
        %v256 = vadd.f32 %v242, %v255
        %257 = vst [vmem:[#allocation3] sm:$0x1] %v256
      $region40: #{batch_norm_edge.1} parent=31 // pred_fallthru
        _
      %p258 = scmp.eq.s32.totalorder %s18, 1
      %p259 = pnand %p258, %p206
      %p260 = pneg %p259
      // Predicated region
      $region41: #{batch_norm_edge.1} parent=31 // pred_check
        _
      $region42: #{batch_norm_edge.1} parent=31 // pred_check_branch
        %262 = sbr.rel (%p259) target = $region44
      $region43: #{batch_norm_edge.1} parent=31 // pred_region
        %v263 = vld [vmem:[#allocation2] sm:$0x1]
        %264 = vrot.lane.b32.xlu0 %v263, 32
        %v265 = vpop.permute.xlu0 %264
        %v266 = vadd.f32 %v263, %v265
        %267 = vrot.lane.b32.xlu0 %v263, 64
        %v268 = vpop.permute.xlu0 %267
        %v269 = vadd.f32 %v266, %v268
        %270 = vrot.lane.b32.xlu0 %v263, 96
        %v271 = vpop.permute.xlu0 %270
        %v272 = vadd.f32 %v269, %v271
        %v273 = vmul.f32 %v272, 0.0078125
        %v274 = vld [vmem:[#allocation3] sm:$0x1]
        %275 = vrot.lane.b32.xlu0 %v274, 32
        %v276 = vpop.permute.xlu0 %275
        %v277 = vadd.f32 %v274, %v276
        %278 = vrot.lane.b32.xlu0 %v274, 64
        %v279 = vpop.permute.xlu0 %278
        %v280 = vadd.f32 %v277, %v279
        %281 = vrot.lane.b32.xlu0 %v274, 96
        %v282 = vpop.permute.xlu0 %281
        %v283 = vadd.f32 %v280, %v282
        %v284 = vmul.f32 %v283, 0.0078125
        %v285 = vmul.f32 %v273, %v273
        %v286 = vsub.f32 %v284, %v285
        %v287 = vmax.f32 %v286, 0.0
        %v288 = vadd.f32 %v287, 1e-05
        %v289 = vrsqrt.pop %v288
        %v290 = vld [vmem:[%s1] sm:$0x1]
        %v291 = vmul.f32 %v290, %v289
        %292 = vst [vmem:[#allocation4] sm:$0x1] %v291
        %v293 = vld [vmem:[%s2] sm:$0x1]
        %v294 = vmul.f32 %v273, %v291
        %v295 = vsub.f32 %v293, %v294
        %296 = vst [vmem:[#allocation5] sm:$0x1] %v295
      $region44: #{batch_norm_edge.1} parent=31 // pred_fallthru
        _
      // Predicated region
      $region45: #{batch_norm_edge.1} parent=31 // pred_check
        %p297 = pneg %p258
      $region46: #{batch_norm_edge.1} parent=31 // pred_check_branch
        %299 = sbr.rel (%p297) target = $region48
      $region47: #{batch_norm_edge.1} parent=31 // pred_region
        %s300 = smul.u32 %s19, 32
        %s301 = scalar_lea.vmem [#allocation6], %s300
        %v302 = vld [vmem:[%s301] sm:$0xff]
        %v303 = vld [vmem:[%s301 + $0x8] sm:$0xff]
        %v304 = vld [vmem:[%s301 + $0x10] sm:$0xff]
        %v305 = vld [vmem:[%s301 + $0x18] sm:$0xff]
        %v306 = vld [vmem:[#allocation4] sm:$0x1]
        %v308 = vlaneseq
        %v309 = vshrl.u32 %v308, 7
        %v310 = vsub.s32 0, %v309
        %v311 = vrot.slane %v306, %v310
        %v313 = vmul.f32 %v302, %v311
        %v314 = vmul.f32 %v303, %v311
        %v315 = vmul.f32 %v304, %v311
        %v316 = vmul.f32 %v305, %v311
        %v317 = vld [vmem:[#allocation5] sm:$0x1]
        %v319 = vlaneseq
        %v320 = vshrl.u32 %v319, 7
        %v321 = vsub.s32 0, %v320
        %v322 = vrot.slane %v317, %v321
        %v324 = vadd.f32 %v313, %v322
        %v325 = vadd.f32 %v314, %v322
        %v326 = vadd.f32 %v315, %v322
        %v327 = vadd.f32 %v316, %v322
        %328 = vst [vmem:[%s202] sm:$0xff] %v324
        %329 = vst [vmem:[%s202 + $0x8] sm:$0xff] %v325
        %330 = vst [vmem:[%s202 + $0x10] sm:$0xff] %v326
        %331 = vst [vmem:[%s202 + $0x18] sm:$0xff] %v327
      $region48: #{batch_norm_edge.1} parent=31 // pred_fallthru
        _
      %s332 = smul.u32 %s18, %s19
      %s333 = smul.u32 4, %s332
      %p334 = scmp.lt.s32.totalorder %s333, 3
      %s335 = scalar_select %p334, %s333, 3
      %s336 = smul.addr %s335, 8
      %s337 = scalar_lea.vmem %s3, %s336
      // Predicated region
      $region49: #{batch_norm_edge.1} parent=31 // pred_check
        %p338 = pneg %p118
      $region50: #{batch_norm_edge.1} parent=31 // pred_check_branch
        %340 = sbr.rel (%p338) target = $region52
      $region51: #{batch_norm_edge.1} parent=31 // pred_region
        %s341 = smul.u32 %s18, %s19
        %s342 = smul.u32 4, %s341
      $region52: #{batch_norm_edge.1} parent=31 // pred_fallthru
        _
    $region32: #{batch_norm_edge.1} parent=5 // pred_fallthru
      _
    %p343 = scmp.le.s32.totalorder 2, %s9
    // Predicated region
    $region53: #{batch_norm_edge.1} parent=5 // pred_check
      %p344 = pneg %p343
    $region54: #{batch_norm_edge.1} parent=5 // pred_check_branch
      %346 = sbr.rel (%p344) target = $region56
    $region55: #{batch_norm_edge.1} parent=5 // pred_region
      %s347 = ssub.s32 %s9, 2
      // Predicated region
      $region57: #{batch_norm_edge.1} parent=55 // pred_check
        %p348 = pneg %p124
      $region58: #{batch_norm_edge.1} parent=55 // pred_check_branch
        %350 = sbr.rel (%p348) target = $region60
      $region59: #{batch_norm_edge.1} parent=55 // pred_region
        %s351 = smul.u32 %s20, %s21
        %s352 = smul.u32 4, %s351
        %p353 = scmp.lt.s32.totalorder %s352, 3
        %s354 = scalar_select %p353, %s352, 3
        %s355 = smul.addr %s354, 8
        %s356 = scalar_lea.vmem %s3, %s355
      $region60: #{batch_norm_edge.1} parent=55 // pred_fallthru
        _
    $region56: #{batch_norm_edge.1} parent=5 // pred_fallthru
      _
  $region6: #{batch_norm_edge.1} parent=0 // loop_footer
    %s13 = sadd.s32 1, %s9
  $region7: #{batch_norm_edge.1} parent=0 // loop_footer_branch
    %8 = sbr.rel target = $region3
  $region8: #{batch_norm_edge.1} parent=0 // loop_exit
    _

</llo_original>
